<compile_context>
chip_gen: v5e
topology: v5e:2x2
jax: 0.10.0
libtpu: 0.0.40
codegen_flags: <defaults>
</compile_context>

<pallas_src>
import functools

import jax
import jax.numpy as jnp
from jax.experimental import pallas as pl
from jax.experimental.pallas import tpu as pltpu


# ---------------------------------------------------------------------------
# Pallas kernels
# ---------------------------------------------------------------------------

def _conv_norm_kernel(x_ref, w_ref, b_ref, o_ref, *, H, W, C, F, KS):
    """Fused 3x3 conv + bias + per-pixel L2 normalize for one padded image.

    x_ref: (1, C, H+KS-1, W+KS-1) bf16 VMEM  padded NCHW image for one (b, v)
    w_ref: (KS*KS*C*F,) f32 SMEM             weights, index ((dy*KS+dx)*C+c)*F+f
    b_ref: (F,) f32 SMEM                     bias
    o_ref: (1, F, H, W) f32 VMEM             normalized features, channel-first
                                             (lane dim = W -> lane-dense stores
                                             at real resolutions)
    """
    # Upcast the whole tile once; all elementwise math stays in f32 (v5e has
    # no bf16 VPU/EUP).
    xf = x_ref[0].astype(jnp.float32)                       # (C, Hp, Wp)

    accs = [jnp.zeros((H, W), jnp.float32) + b_ref[f] for f in range(F)]
    for dy in range(KS):
        for dx in range(KS):
            for c in range(C):
                tap = xf[c, dy:dy + H, dx:dx + W]           # (H, W) shifted tap
                base = ((dy * KS + dx) * C + c) * F
                for f in range(F):
                    accs[f] = accs[f] + w_ref[base + f] * tap

    # torch.nn.functional.normalize(dim=feature), eps=1e-12:
    #   x / max(||x||, eps) == x * rsqrt(max(||x||^2, eps^2))
    sumsq = accs[0] * accs[0]
    for f in range(1, F):
        sumsq = sumsq + accs[f] * accs[f]
    inv = jax.lax.rsqrt(jnp.maximum(sumsq, 1e-24))
    for f in range(F):
        o_ref[0, f] = accs[f] * inv


def _calib_xyz_kernel(g_ref, kinv_ref, dep_ref, xy1_ref, xyz_ref):
    """Fused calibration + unprojection: xy1 = K^-1 @ [x; y; 1], xyz = xy1 * d.

    g_ref:    (3, HW) f32 VMEM       homogeneous pixel grid rows (x, y, 1)
    kinv_ref: (B*9,) f32 SMEM        row-major flattened K^-1 per batch element
    dep_ref:  (1, 1, 1, HW) f32 VMEM depth for (b, v), HW on the lane dim
    xy1_ref:  (1, 3, HW) f32 VMEM    per-batch calibrated grid (block constant
                                     across the v axis -> written redundantly)
    xyz_ref:  (1, 1, 3, HW) f32 VMEM camera-space points for (b, v)
    """
    b = pl.program_id(0)
    d = dep_ref[0, 0]                                        # (1, HW)
    for i in range(3):
        r = (kinv_ref[b * 9 + 3 * i + 0] * g_ref[0:1, :]
             + kinv_ref[b * 9 + 3 * i + 1] * g_ref[1:2, :]
             + kinv_ref[b * 9 + 3 * i + 2] * g_ref[2:3, :])  # (1, HW)
        xy1_ref[0, i:i + 1, :] = r
        xyz_ref[0, 0, i:i + 1, :] = r * d


# ---------------------------------------------------------------------------
# Pallas wrappers
# ---------------------------------------------------------------------------

def conv_features_normalized(x_pad, w, b, *, H, W):
    """x_pad: (N, C, H+k-1, W+k-1) bf16, w: (k, k, C, F), b: (F,)
    -> (N, F, H, W) f32, L2-normalized over F per pixel."""
    N, C, Hp, Wp = x_pad.shape
    KS = w.shape[0]
    F = w.shape[-1]
    w_flat = w.reshape(-1).astype(jnp.float32)   # index ((dy*KS+dx)*C+c)*F+f
    b_flat = b.astype(jnp.float32)
    kernel = functools.partial(_conv_norm_kernel, H=H, W=W, C=C, F=F, KS=KS)
    # TODO(synk): at large resolutions tile over H (with a 1-row halo) so the
    # per-image block and in-kernel temporaries stay well under v7x's 64 MiB.
    return pl.pallas_call(
        kernel,
        out_shape=jax.ShapeDtypeStruct((N, F, H, W), jnp.float32),
        grid=(N,),
        in_specs=[
            pl.BlockSpec((1, C, Hp, Wp), lambda n: (n, 0, 0, 0)),
            pl.BlockSpec(memory_space=pltpu.MemorySpace.SMEM),
            pl.BlockSpec(memory_space=pltpu.MemorySpace.SMEM),
        ],
        out_specs=pl.BlockSpec((1, F, H, W), lambda n: (n, 0, 0, 0)),
        compiler_params=pltpu.CompilerParams(
            dimension_semantics=("parallel",),
            vmem_limit_bytes=32 * 1024 * 1024),
    )(x_pad, w_flat, b_flat)


def calib_and_unproject(grid_t, kinv_flat, depth_lane):
    """grid_t: (3, HW), kinv_flat: (B*9,), depth_lane: (B, V, 1, HW)
    -> xy1 (B, 3, HW), xyz_cam (B, V, 3, HW)."""
    HW = grid_t.shape[1]
    B, V = depth_lane.shape[0], depth_lane.shape[1]
    return pl.pallas_call(
        _calib_xyz_kernel,
        out_shape=(jax.ShapeDtypeStruct((B, 3, HW), jnp.float32),
                   jax.ShapeDtypeStruct((B, V, 3, HW), jnp.float32)),
        grid=(B, V),
        in_specs=[
            pl.BlockSpec((3, HW), lambda bi, vi: (0, 0)),
            pl.BlockSpec(memory_space=pltpu.MemorySpace.SMEM),
            pl.BlockSpec((1, 1, 1, HW), lambda bi, vi: (bi, vi, 0, 0)),
        ],
        out_specs=(
            pl.BlockSpec((1, 3, HW), lambda bi, vi: (bi, 0, 0)),
            pl.BlockSpec((1, 1, 3, HW), lambda bi, vi: (bi, vi, 0, 0)),
        ),
        compiler_params=pltpu.CompilerParams(
            dimension_semantics=("parallel", "arbitrary"),
            vmem_limit_bytes=32 * 1024 * 1024),
    )(grid_t, kinv_flat, depth_lane)


# ---------------------------------------------------------------------------
# Module glue (plain JAX)
# ---------------------------------------------------------------------------

def get_grid(H, W):
    """Homogeneous pixel grid (3, H, W): channels = (x, y, 1)."""
    y, x = jnp.meshgrid(jnp.arange(H, dtype=jnp.float32),
                        jnp.arange(W, dtype=jnp.float32), indexing="ij")
    return jnp.stack([x, y, jnp.ones_like(x)], axis=0)


class MultiviewScreenPallas:
    """JAX/Pallas re-implementation of syncmatch MultiviewScreen.forward."""

    def __init__(self, feat_dim=8, ksize=3, sampling="all", seed=42):
        self.feat_dim = feat_dim
        self.ksize = ksize
        self.sampling = sampling
        # Deterministic synthetic backbone weights: Conv2d(3, feat_dim, 3, pad=1)
        key = jax.random.PRNGKey(seed)
        wk, bk = jax.random.split(key)
        fan_in = ksize * ksize * 3
        self.w = (jax.random.normal(wk, (ksize, ksize, 3, feat_dim), jnp.float32)
                  / jnp.sqrt(float(fan_in)))
        self.b = 0.01 * jax.random.normal(bk, (feat_dim,), jnp.float32)

    # ----- feature backbone (fused conv + normalize in Pallas) -----
    def get_features(self, rgbs_bv):
        """rgbs_bv: (B, V, 3, H, W) -> ([(B, V, F, H, W)], (B, V, H*W, F))."""
        B, V, C, H, W = rgbs_bv.shape
        k = self.ksize
        pad = k // 2
        N = B * V
        # Padded NCHW image in bf16 (halves HBM read bytes); the im2col is
        # done inside the kernel, so no 9x patch intermediate exists in HBM.
        x_pad = jnp.pad(rgbs_bv.reshape(N, C, H, W).astype(jnp.bfloat16),
                        ((0, 0), (0, 0), (pad, pad), (pad, pad)))
        feats_lane = conv_features_normalized(x_pad, self.w, self.b, H=H, W=W)
        feats_nchw = feats_lane.reshape(B, V, self.feat_dim, H, W)   # free reshape
        feats_pc = jnp.transpose(
            feats_lane.reshape(B, V, self.feat_dim, H * W), (0, 1, 3, 2))
        return [feats_nchw], feats_pc

    def _make_IJs(self, num_views):
        IJs = []
        for i in range(num_views - 1):
            IJs.append((i, i + 1))
            if self.sampling == "all":
                for j in range(i + 2, num_views):
                    IJs.append((i, j))
            # TODO(synk): stochastic 'localsparse'/'sparse_*' sampling branches
            # depend on torch RNG; only the deterministic 'all' path is built.
        return IJs

    # ----- forward -----
    def forward(self, rgbs, deps, K, rng_key):
        """rgbs: list of (B, 3, H, W); deps: list of (B, 1, H, W); K: (B, 3, 3)."""
        # ---------------- setup_screen ----------------
        screen = {}
        rgbs_bv = jnp.stack(rgbs, axis=1)                  # (B, V, 3, H, W)
        B, V, _, H, W = rgbs_bv.shape
        HW = H * W
        screen["rgbs"] = rgbs_bv
        screen["batch"], screen["num_views"] = B, V
        screen["H"], screen["W"] = H, W
        screen["IJs"] = self._make_IJs(V)

        grid = get_grid(H, W)                               # (3, H, W)
        grid_t = grid.reshape(3, HW)                        # (3, HW), HW on lanes
        screen["xyh_uncal"] = jnp.broadcast_to(grid[None], (B, 3, H, W))

        depth_bv = jnp.stack(deps, axis=1)                  # (B, V, 1, H, W)
        screen["depth"] = depth_bv
        depth_lane = depth_bv.reshape(B, V, 1, HW)          # HW on lanes

        Kinv = jnp.linalg.inv(K)                            # (B, 3, 3)   (glue)
        kinv_flat = Kinv.reshape(-1).astype(jnp.float32)    # (B*9,) row-major

        # Fused calibration + unprojection (single Pallas kernel, lane-dense).
        xy1_lane, xyz_lane = calib_and_unproject(grid_t, kinv_flat, depth_lane)
        # xy1_lane: (B, 3, HW); xyz_lane: (B, V, 3, HW)

        screen["xyh_cal"] = jnp.broadcast_to(
            xy1_lane.reshape(B, 1, 3, H, W), (B, V, 3, H, W))

        feats_list, feats_pc = self.get_features(rgbs_bv)   # Pallas fused conv
        screen["feats"] = feats_list                        # [(B, V, F, H, W)]

        # ---------------- setup_pc ----------------
        pc = {}
        pc["batch"], pc["num_views"], pc["feat_dim"] = B, V, self.feat_dim
        pc["H"], pc["W"] = H, W
        pc["IJs"] = screen["IJs"]

        pc["feats"] = feats_pc                                           # (B,V,HW,F)
        xy1_pc = jnp.transpose(xy1_lane, (0, 2, 1))                      # (B,HW,3)
        pc["xy1"] = jnp.broadcast_to(xy1_pc[:, None], (B, V, HW, 3))
        pc["depth"] = jnp.swapaxes(depth_lane, 2, 3)                     # (B,V,HW,1)
        uv = jnp.transpose(grid_t[:2], (1, 0))                           # (HW, 2)
        pc["uv_screen"] = jnp.broadcast_to(uv[None, None], (B, V, HW, 2))

        xyz_cam = jnp.transpose(xyz_lane, (0, 1, 3, 2))                  # (B,V,HW,3)
        pc["xyz_cam"] = xyz_cam

        # blurred subset (stochastic; no_grad branch in torch)
        step_h = max(H // 10, 1)   # guard degenerate H<10 / W<10
        step_w = max(W // 10, 1)
        idx = (jnp.arange(H // 20, H, step_h)[:, None] * W
               + jnp.arange(W // 20, W, step_w)).reshape(-1)
        blur = xyz_cam[:, :, idx]
        # TODO(synk): torch.rand_like uses the torch RNG; jax.random is used here,
        # so xyz_cam_blur is stochastic-equivalent but not bit-exact.
        rand = jax.random.uniform(rng_key, blur[..., :1].shape, jnp.float32) + 0.5
        pc["xyz_cam_blur"] = blur * rand
        pc["xyz_world"] = xyz_cam
        return screen, pc


# ---------------------------------------------------------------------------
# Demo
# ---------------------------------------------------------------------------

if __name__ == "__main__":
    B, V, H, W, F = 2, 3, 16, 16, 8

    key = jax.random.PRNGKey(0)
    k_rgb, k_dep, k_blur = jax.random.split(key, 3)

    rgbs = [jax.random.normal(jax.random.fold_in(k_rgb, v), (B, 3, H, W),
                              jnp.float32) for v in range(V)]
    deps = [jax.random.uniform(jax.random.fold_in(k_dep, v), (B, 1, H, W),
                               jnp.float32, minval=0.5, maxval=4.0)
            for v in range(V)]
    fx = fy = float(W)
    K = jnp.broadcast_to(
        jnp.array([[fx, 0.0, W / 2.0],
                   [0.0, fy, H / 2.0],
                   [0.0, 0.0, 1.0]], jnp.float32)[None], (B, 3, 3))

    model = MultiviewScreenPallas(feat_dim=F, ksize=3, sampling="all", seed=42)
    screen, pc = model.forward(rgbs, deps, K, k_blur)

    # Block on all array outputs.
    jax.block_until_ready(
        jax.tree_util.tree_leaves((screen["feats"], screen["xyh_cal"],
                                   pc["feats"], pc["xy1"], pc["xyz_cam"],
                                   pc["xyz_cam_blur"], pc["uv_screen"])))

    # Light sanity checks on shapes / finiteness.
    assert screen["feats"][0].shape == (B, V, F, H, W)
    assert screen["xyh_cal"].shape == (B, V, 3, H, W)
    assert pc["feats"].shape == (B, V, H * W, F)
    assert pc["xyz_cam"].shape == (B, V, H * W, 3)
    assert bool(jnp.all(jnp.isfinite(pc["xyz_cam"])))
    assert bool(jnp.all(jnp.isfinite(pc["feats"])))

    print("KERNEL_OK")
</pallas_src>

<mosaic_0001>
module attributes {stable_mosaic.version = 11 : i64} {
  func.func @_calib_xyz_kernel(%arg0: i32, %arg1: i32, %arg2: memref<3x256xf32, #tpu.memory_space<vmem>>, %arg3: memref<18xf32, #tpu.memory_space<smem>>, %arg4: memref<1x1x1x256xf32, #tpu.memory_space<vmem>>, %arg5: memref<1x3x256xf32, #tpu.memory_space<vmem>>, %arg6: memref<1x1x3x256xf32, #tpu.memory_space<vmem>>) attributes {dimension_semantics = [#tpu.dimension_semantics<parallel>, #tpu.dimension_semantics<arbitrary>], iteration_bounds = array<i64: 2, 3>, scalar_prefetch = 0 : i64, scratch_operands = 0 : i64, tpu.core_type = #tpu.core_type<tc>, window_params = [{pipeline_mode = #tpu.pipeline_mode<synchronous>, transform_indices = @transform_0, window_bounds = array<i64: 3, 256>}, {transform_indices = @transform_1, window_bounds = array<i64: 18>}, {transform_indices = @transform_2, window_bounds = array<i64: 1, 1, 1, 256>}, {transform_indices = @transform_3, window_bounds = array<i64: 1, 3, 256>}, {transform_indices = @transform_4, window_bounds = array<i64: 1, 1, 3, 256>}]} {
    %c0 = arith.constant 0 : index
    %c0_0 = arith.constant 0 : index
    %c0_1 = arith.constant 0 : index
    %c0_2 = arith.constant 0 : index
    %0 = vector.load %arg4[%c0, %c0_0, %c0_1, %c0_2] : memref<1x1x1x256xf32, #tpu.memory_space<vmem>>, vector<1x1x1x256xf32>
    %1 = vector.shape_cast %0 : vector<1x1x1x256xf32> to vector<1x256xf32>
    %c9_i32 = arith.constant 9 : i32
    %2 = arith.muli %arg0, %c9_i32 : i32
    %c0_i32 = arith.constant 0 : i32
    %3 = arith.addi %2, %c0_i32 : i32
    %c0_i32_3 = arith.constant 0 : i32
    %4 = arith.addi %3, %c0_i32_3 : i32
    %5 = arith.index_cast %4 : i32 to index
    %6 = memref.load %arg3[%5] : memref<18xf32, #tpu.memory_space<smem>>
    %c0_4 = arith.constant 0 : index
    %c0_5 = arith.constant 0 : index
    %7 = vector.load %arg2[%c0_4, %c0_5] : memref<3x256xf32, #tpu.memory_space<vmem>>, vector<1x256xf32>
    %8 = vector.broadcast %6 : f32 to vector<1x256xf32>
    %9 = arith.mulf %8, %7 : vector<1x256xf32>
    %c9_i32_6 = arith.constant 9 : i32
    %10 = arith.muli %arg0, %c9_i32_6 : i32
    %c0_i32_7 = arith.constant 0 : i32
    %11 = arith.addi %10, %c0_i32_7 : i32
    %c1_i32 = arith.constant 1 : i32
    %12 = arith.addi %11, %c1_i32 : i32
    %13 = arith.index_cast %12 : i32 to index
    %14 = memref.load %arg3[%13] : memref<18xf32, #tpu.memory_space<smem>>
    %c1 = arith.constant 1 : index
    %c0_8 = arith.constant 0 : index
    %15 = vector.load %arg2[%c1, %c0_8] : memref<3x256xf32, #tpu.memory_space<vmem>>, vector<1x256xf32>
    %16 = vector.broadcast %14 : f32 to vector<1x256xf32>
    %17 = arith.mulf %16, %15 : vector<1x256xf32>
    %18 = arith.addf %9, %17 : vector<1x256xf32>
    %c9_i32_9 = arith.constant 9 : i32
    %19 = arith.muli %arg0, %c9_i32_9 : i32
    %c0_i32_10 = arith.constant 0 : i32
    %20 = arith.addi %19, %c0_i32_10 : i32
    %c2_i32 = arith.constant 2 : i32
    %21 = arith.addi %20, %c2_i32 : i32
    %22 = arith.index_cast %21 : i32 to index
    %23 = memref.load %arg3[%22] : memref<18xf32, #tpu.memory_space<smem>>
    %c2 = arith.constant 2 : index
    %c0_11 = arith.constant 0 : index
    %24 = vector.load %arg2[%c2, %c0_11] : memref<3x256xf32, #tpu.memory_space<vmem>>, vector<1x256xf32>
    %25 = vector.broadcast %23 : f32 to vector<1x256xf32>
    %26 = arith.mulf %25, %24 : vector<1x256xf32>
    %27 = arith.addf %18, %26 : vector<1x256xf32>
    %c0_12 = arith.constant 0 : index
    %c0_13 = arith.constant 0 : index
    %c0_14 = arith.constant 0 : index
    %28 = vector.load %arg5[%c0_12, %c0_13, %c0_14] : memref<1x3x256xf32, #tpu.memory_space<vmem>>, vector<1x1x256xf32>
    %29 = vector.shape_cast %28 : vector<1x1x256xf32> to vector<1x256xf32>
    %30 = vector.shape_cast %27 : vector<1x256xf32> to vector<1x1x256xf32>
    tpu.vector_store %arg5[%c0_12, %c0_13, %c0_14], %30 {strides = array<i32>} : memref<1x3x256xf32, #tpu.memory_space<vmem>>, vector<1x1x256xf32>,
    %31 = arith.mulf %27, %1 : vector<1x256xf32>
    %c0_15 = arith.constant 0 : index
    %c0_16 = arith.constant 0 : index
    %c0_17 = arith.constant 0 : index
    %c0_18 = arith.constant 0 : index
    %32 = vector.load %arg6[%c0_15, %c0_16, %c0_17, %c0_18] : memref<1x1x3x256xf32, #tpu.memory_space<vmem>>, vector<1x1x1x256xf32>
    %33 = vector.shape_cast %32 : vector<1x1x1x256xf32> to vector<1x256xf32>
    %34 = vector.shape_cast %31 : vector<1x256xf32> to vector<1x1x1x256xf32>
    tpu.vector_store %arg6[%c0_15, %c0_16, %c0_17, %c0_18], %34 {strides = array<i32>} : memref<1x1x3x256xf32, #tpu.memory_space<vmem>>, vector<1x1x1x256xf32>,
    %c9_i32_19 = arith.constant 9 : i32
    %35 = arith.muli %arg0, %c9_i32_19 : i32
    %c3_i32 = arith.constant 3 : i32
    %36 = arith.addi %35, %c3_i32 : i32
    %c0_i32_20 = arith.constant 0 : i32
    %37 = arith.addi %36, %c0_i32_20 : i32
    %38 = arith.index_cast %37 : i32 to index
    %39 = memref.load %arg3[%38] : memref<18xf32, #tpu.memory_space<smem>>
    %c0_21 = arith.constant 0 : index
    %c0_22 = arith.constant 0 : index
    %40 = vector.load %arg2[%c0_21, %c0_22] : memref<3x256xf32, #tpu.memory_space<vmem>>, vector<1x256xf32>
    %41 = vector.broadcast %39 : f32 to vector<1x256xf32>
    %42 = arith.mulf %41, %40 : vector<1x256xf32>
    %c9_i32_23 = arith.constant 9 : i32
    %43 = arith.muli %arg0, %c9_i32_23 : i32
    %c3_i32_24 = arith.constant 3 : i32
    %44 = arith.addi %43, %c3_i32_24 : i32
    %c1_i32_25 = arith.constant 1 : i32
    %45 = arith.addi %44, %c1_i32_25 : i32
    %46 = arith.index_cast %45 : i32 to index
    %47 = memref.load %arg3[%46] : memref<18xf32, #tpu.memory_space<smem>>
    %c1_26 = arith.constant 1 : index
    %c0_27 = arith.constant 0 : index
    %48 = vector.load %arg2[%c1_26, %c0_27] : memref<3x256xf32, #tpu.memory_space<vmem>>, vector<1x256xf32>
    %49 = vector.broadcast %47 : f32 to vector<1x256xf32>
    %50 = arith.mulf %49, %48 : vector<1x256xf32>
    %51 = arith.addf %42, %50 : vector<1x256xf32>
    %c9_i32_28 = arith.constant 9 : i32
    %52 = arith.muli %arg0, %c9_i32_28 : i32
    %c3_i32_29 = arith.constant 3 : i32
    %53 = arith.addi %52, %c3_i32_29 : i32
    %c2_i32_30 = arith.constant 2 : i32
    %54 = arith.addi %53, %c2_i32_30 : i32
    %55 = arith.index_cast %54 : i32 to index
    %56 = memref.load %arg3[%55] : memref<18xf32, #tpu.memory_space<smem>>
    %c2_31 = arith.constant 2 : index
    %c0_32 = arith.constant 0 : index
    %57 = vector.load %arg2[%c2_31, %c0_32] : memref<3x256xf32, #tpu.memory_space<vmem>>, vector<1x256xf32>
    %58 = vector.broadcast %56 : f32 to vector<1x256xf32>
    %59 = arith.mulf %58, %57 : vector<1x256xf32>
    %60 = arith.addf %51, %59 : vector<1x256xf32>
    %c0_33 = arith.constant 0 : index
    %c1_34 = arith.constant 1 : index
    %c0_35 = arith.constant 0 : index
    %61 = vector.load %arg5[%c0_33, %c1_34, %c0_35] : memref<1x3x256xf32, #tpu.memory_space<vmem>>, vector<1x1x256xf32>
    %62 = vector.shape_cast %61 : vector<1x1x256xf32> to vector<1x256xf32>
    %63 = vector.shape_cast %60 : vector<1x256xf32> to vector<1x1x256xf32>
    tpu.vector_store %arg5[%c0_33, %c1_34, %c0_35], %63 {strides = array<i32>} : memref<1x3x256xf32, #tpu.memory_space<vmem>>, vector<1x1x256xf32>,
    %64 = arith.mulf %60, %1 : vector<1x256xf32>
    %c0_36 = arith.constant 0 : index
    %c0_37 = arith.constant 0 : index
    %c1_38 = arith.constant 1 : index
    %c0_39 = arith.constant 0 : index
    %65 = vector.load %arg6[%c0_36, %c0_37, %c1_38, %c0_39] : memref<1x1x3x256xf32, #tpu.memory_space<vmem>>, vector<1x1x1x256xf32>
    %66 = vector.shape_cast %65 : vector<1x1x1x256xf32> to vector<1x256xf32>
    %67 = vector.shape_cast %64 : vector<1x256xf32> to vector<1x1x1x256xf32>
    tpu.vector_store %arg6[%c0_36, %c0_37, %c1_38, %c0_39], %67 {strides = array<i32>} : memref<1x1x3x256xf32, #tpu.memory_space<vmem>>, vector<1x1x1x256xf32>,
    %c9_i32_40 = arith.constant 9 : i32
    %68 = arith.muli %arg0, %c9_i32_40 : i32
    %c6_i32 = arith.constant 6 : i32
    %69 = arith.addi %68, %c6_i32 : i32
    %c0_i32_41 = arith.constant 0 : i32
    %70 = arith.addi %69, %c0_i32_41 : i32
    %71 = arith.index_cast %70 : i32 to index
    %72 = memref.load %arg3[%71] : memref<18xf32, #tpu.memory_space<smem>>
    %c0_42 = arith.constant 0 : index
    %c0_43 = arith.constant 0 : index
    %73 = vector.load %arg2[%c0_42, %c0_43] : memref<3x256xf32, #tpu.memory_space<vmem>>, vector<1x256xf32>
    %74 = vector.broadcast %72 : f32 to vector<1x256xf32>
    %75 = arith.mulf %74, %73 : vector<1x256xf32>
    %c9_i32_44 = arith.constant 9 : i32
    %76 = arith.muli %arg0, %c9_i32_44 : i32
    %c6_i32_45 = arith.constant 6 : i32
    %77 = arith.addi %76, %c6_i32_45 : i32
    %c1_i32_46 = arith.constant 1 : i32
    %78 = arith.addi %77, %c1_i32_46 : i32
    %79 = arith.index_cast %78 : i32 to index
    %80 = memref.load %arg3[%79] : memref<18xf32, #tpu.memory_space<smem>>
    %c1_47 = arith.constant 1 : index
    %c0_48 = arith.constant 0 : index
    %81 = vector.load %arg2[%c1_47, %c0_48] : memref<3x256xf32, #tpu.memory_space<vmem>>, vector<1x256xf32>
    %82 = vector.broadcast %80 : f32 to vector<1x256xf32>
    %83 = arith.mulf %82, %81 : vector<1x256xf32>
    %84 = arith.addf %75, %83 : vector<1x256xf32>
    %c9_i32_49 = arith.constant 9 : i32
    %85 = arith.muli %arg0, %c9_i32_49 : i32
    %c6_i32_50 = arith.constant 6 : i32
    %86 = arith.addi %85, %c6_i32_50 : i32
    %c2_i32_51 = arith.constant 2 : i32
    %87 = arith.addi %86, %c2_i32_51 : i32
    %88 = arith.index_cast %87 : i32 to index
    %89 = memref.load %arg3[%88] : memref<18xf32, #tpu.memory_space<smem>>
    %c2_52 = arith.constant 2 : index
    %c0_53 = arith.constant 0 : index
    %90 = vector.load %arg2[%c2_52, %c0_53] : memref<3x256xf32, #tpu.memory_space<vmem>>, vector<1x256xf32>
    %91 = vector.broadcast %89 : f32 to vector<1x256xf32>
    %92 = arith.mulf %91, %90 : vector<1x256xf32>
    %93 = arith.addf %84, %92 : vector<1x256xf32>
    %c0_54 = arith.constant 0 : index
    %c2_55 = arith.constant 2 : index
    %c0_56 = arith.constant 0 : index
    %94 = vector.load %arg5[%c0_54, %c2_55, %c0_56] : memref<1x3x256xf32, #tpu.memory_space<vmem>>, vector<1x1x256xf32>
    %95 = vector.shape_cast %94 : vector<1x1x256xf32> to vector<1x256xf32>
    %96 = vector.shape_cast %93 : vector<1x256xf32> to vector<1x1x256xf32>
    tpu.vector_store %arg5[%c0_54, %c2_55, %c0_56], %96 {strides = array<i32>} : memref<1x3x256xf32, #tpu.memory_space<vmem>>, vector<1x1x256xf32>,
    %97 = arith.mulf %93, %1 : vector<1x256xf32>
    %c0_57 = arith.constant 0 : index
    %c0_58 = arith.constant 0 : index
    %c2_59 = arith.constant 2 : index
    %c0_60 = arith.constant 0 : index
    %98 = vector.load %arg6[%c0_57, %c0_58, %c2_59, %c0_60] : memref<1x1x3x256xf32, #tpu.memory_space<vmem>>, vector<1x1x1x256xf32>
    %99 = vector.shape_cast %98 : vector<1x1x1x256xf32> to vector<1x256xf32>
    %100 = vector.shape_cast %97 : vector<1x256xf32> to vector<1x1x1x256xf32>
    tpu.vector_store %arg6[%c0_57, %c0_58, %c2_59, %c0_60], %100 {strides = array<i32>} : memref<1x1x3x256xf32, #tpu.memory_space<vmem>>, vector<1x1x1x256xf32>,
    return
  }
  func.func @transform_0(%arg0: i32, %arg1: i32) -> (i32, i32) {
    %c0_i32 = arith.constant 0 : i32
    %c0_i32_0 = arith.constant 0 : i32
    %c0_i32_1 = arith.constant 0 : i32
    return %c0_i32, %c0_i32_0 : i32, i32
  }
  func.func @transform_1(%arg0: i32, %arg1: i32) -> i32 {
    %c0_i32 = arith.constant 0 : i32
    %c0_i32_0 = arith.constant 0 : i32
    return %c0_i32 : i32
  }
  func.func @transform_2(%arg0: i32, %arg1: i32) -> (i32, i32, i32, i32) {
    %c0_i32 = arith.constant 0 : i32
    %c0_i32_0 = arith.constant 0 : i32
    %c0_i32_1 = arith.constant 0 : i32
    return %arg0, %arg1, %c0_i32, %c0_i32_0 : i32, i32, i32, i32
  }
  func.func @transform_3(%arg0: i32, %arg1: i32) -> (i32, i32, i32) {
    %c0_i32 = arith.constant 0 : i32
    %c0_i32_0 = arith.constant 0 : i32
    %c0_i32_1 = arith.constant 0 : i32
    return %arg0, %c0_i32, %c0_i32_0 : i32, i32, i32
  }
  func.func @transform_4(%arg0: i32, %arg1: i32) -> (i32, i32, i32, i32) {
    %c0_i32 = arith.constant 0 : i32
    %c0_i32_0 = arith.constant 0 : i32
    %c0_i32_1 = arith.constant 0 : i32
    return %arg0, %arg1, %c0_i32, %c0_i32_0 : i32, i32, i32, i32
  }
}

</mosaic_0001>

<llo_original>
// kernel: tpu_custom_call.1
$region0: #{tpu_custom_call.1}
  #allocation0 [shape = 'u32[]', space=smem, size = 0x4, offset = 0x4, fixed_abs, tag = 'smem constant byte address 0x4 - core index']
  #allocation1 [shape = 'u32[72,128]{1,0:T(1,128)}', space=vmem, size = 0x9000, scoped, tag = 'internal scratch']
  %s0 = inlined_call_operand.hbm [shape: f32[3,256], index: 0, kind: input, shape index: {}]
  %s1 = inlined_call_operand.hbm [shape: f32[18], index: 1, kind: input, shape index: {}]
  %s2 = inlined_call_operand.hbm [shape: f32[2,3,1,256], index: 2, kind: input, shape index: {}]
  %s3 = inlined_call_operand.vmem [shape: f32[2,3,256], index: 3, kind: output, shape index: {0}]
  %s4 = inlined_call_operand.vmem [shape: f32[2,3,3,256], index: 4, kind: output, shape index: {1}]
  %5 = xla_tuple %s3, %s4
  %s6 = sld [smem:[#allocation0]]
  $region65: #{tpu_custom_call.1} parent=0
    _
  %s8 = ssub.s32 1, %s6
  %s9 = scalar_select 0, %s8, %s6
  $region1: #{tpu_custom_call.1} parent=0
    #allocation2 [shape = 'u8[4096]{0}', space=vmem, size = 0x1000, scoped, tag = 'input window, operand 0, single buffered']
    #allocation3 [shape = 's32[2]{0}', space=sflag, size = 0x8, scoped, tag = 'scoped memory for tpu_custom_call.1']
    #allocation4 [shape = 's32[2]{0}', space=sflag, size = 0x8, scoped, tag = 'scoped memory for tpu_custom_call.1']
    #allocation5 [shape = 'u8[512]{0}', space=smem, size = 0x200, scoped, tag = 'input window, operand 1, single buffered']
    #allocation6 [shape = 'u8[2048]{0}', space=vmem, size = 0x800, scoped, tag = 'input window, operand 2']
    #allocation7 [shape = 's32[2]{0}', space=sflag, size = 0x8, scoped, tag = 'scoped memory for tpu_custom_call.1']
    %10 = vsyncpa [#allocation3], 0
    %11 = vsyncpa [#allocation4], 0
    %12 = vsyncpa [#allocation7], 0
    %s13 = scalar_lea.sflag [#allocation7], 1
    %14 = vsyncpa %s13, 0
    loop: start=0, step=1, limit=8
    $region2: #{tpu_custom_call.1} parent=1 // loop_pre_header
      _
    $region3: #{tpu_custom_call.1} parent=1 // loop_header
      %s16 = sphi 0, %s20
      %p17 = scmp.ge.s32.totalorder %s16, 8
      %s23 = sphi 0, %s35
      %s24 = sphi 0, %s31
      %s25 = sphi 0, %s23
      %s26 = sphi 0, %s24
      %s27 = sphi 0, %s25
      %s28 = sphi 0, %s26
      %s36 = sphi 0, %s36
      %s38 = sphi 0, %s36
      %s39 = sphi 0, %s38
      %s53 = sphi 0, %s39
      %s57 = sphi 0, %s57
      %s59 = sphi 0, %s57
      %s60 = sphi 0, %s59
      %s74 = sphi 0, %s60
      %s82 = sphi 0, %s84
      %s85 = sphi 0, %s82
      %s86 = sphi 0, %s85
      %s102 = sphi 0, %s86
      %s108 = sphi 0, %s110
      %s111 = sphi 0, %s108
      %s112 = sphi 0, %s111
      %s128 = sphi 0, %s112
      %s136 = sphi 0, %s138
      %s139 = sphi 0, %s136
      %s140 = sphi 0, %s139
      %s156 = sphi 0, %s140
    $region4: #{tpu_custom_call.1} parent=1 // loop_header_branch
      %19 = sbr.rel (%p17) target = $region8
    $region5: #{tpu_custom_call.1} parent=1 // loop_body
      %s21 = ssub.s32 %s16, 1
      %s22 = ssub.s32 %s16, 2
      %s29 = sadd.s32 1, %s24
      %p30 = scmp.ge.s32.totalorder %s29, 3
      %s31 = scalar_select %p30, 0, %s29
      %s32 = sadd.s32 1, %s23
      %s33 = scalar_select %p30, %s32, %s23
      %p34 = scmp.ge.s32.totalorder %s33, 2
      %s35 = scalar_select %p34, 0, %s33
      %s37 = sadd.s32 %s36, 1
      %p40 = scmp.eq.s32.totalorder %s16, 5
      %p41 = scmp.ne.s32.totalorder %s36, %s38
      %p42 = scmp.eq.s32.totalorder %s16, 0
      %p43 = por %p41, %p42
      %p44 = scmp.ne.s32.totalorder %s36, %s38
      %p45 = scmp.eq.s32.totalorder %s21, 5
      %p46 = por %p44, %p45
      %p47 = scmp.ne.s32.totalorder %s38, %s39
      %p48 = scmp.eq.s32.totalorder %s21, 0
      %p49 = por %p47, %p48
      %p50 = scmp.ne.s32.totalorder %s38, %s39
      %p51 = scmp.eq.s32.totalorder %s22, 5
      %p52 = por %p50, %p51
      %p54 = scmp.ne.s32.totalorder %s39, %s53
      %p55 = scmp.eq.s32.totalorder %s22, 0
      %p56 = por %p54, %p55
      %s58 = sadd.s32 %s57, 1
      %p61 = scmp.eq.s32.totalorder %s16, 5
      %p62 = scmp.ne.s32.totalorder %s57, %s59
      %p63 = scmp.eq.s32.totalorder %s16, 0
      %p64 = por %p62, %p63
      %p65 = scmp.ne.s32.totalorder %s57, %s59
      %p66 = scmp.eq.s32.totalorder %s21, 5
      %p67 = por %p65, %p66
      %p68 = scmp.ne.s32.totalorder %s59, %s60
      %p69 = scmp.eq.s32.totalorder %s21, 0
      %p70 = por %p68, %p69
      %p71 = scmp.ne.s32.totalorder %s59, %s60
      %p72 = scmp.eq.s32.totalorder %s22, 5
      %p73 = por %p71, %p72
      %p75 = scmp.ne.s32.totalorder %s60, %s74
      %p76 = scmp.eq.s32.totalorder %s22, 0
      %p77 = por %p75, %p76
      %s78 = ssub.s32 %s23, %s35
      %s79 = ssub.s32 %s24, %s31
      %s80 = sor.u32 %s78, %s79
      %p81 = scmp.eq.s32.totalorder %s80, 0
      %s83 = sadd.s32 %s82, 1
      %s84 = scalar_select %p81, %s82, %s83
      %p87 = pneg %p81
      %p88 = scmp.eq.s32.totalorder %s16, 5
      %p89 = por %p87, %p88
      %p90 = scmp.ne.s32.totalorder %s82, %s85
      %p91 = scmp.eq.s32.totalorder %s16, 0
      %p92 = por %p90, %p91
      %p93 = scmp.ne.s32.totalorder %s82, %s85
      %p94 = scmp.eq.s32.totalorder %s21, 5
      %p95 = por %p93, %p94
      %p96 = scmp.ne.s32.totalorder %s85, %s86
      %p97 = scmp.eq.s32.totalorder %s21, 0
      %p98 = por %p96, %p97
      %p99 = scmp.ne.s32.totalorder %s85, %s86
      %p100 = scmp.eq.s32.totalorder %s22, 5
      %p101 = por %p99, %p100
      %p103 = scmp.ne.s32.totalorder %s86, %s102
      %p104 = scmp.eq.s32.totalorder %s22, 0
      %p105 = por %p103, %p104
      %s106 = ssub.s32 %s23, %s35
      %p107 = scmp.eq.s32.totalorder %s106, 0
      %s109 = sadd.s32 %s108, 1
      %s110 = scalar_select %p107, %s108, %s109
      %p113 = pneg %p107
      %p114 = scmp.eq.s32.totalorder %s16, 5
      %p115 = por %p113, %p114
      %p116 = scmp.ne.s32.totalorder %s108, %s111
      %p117 = scmp.eq.s32.totalorder %s16, 0
      %p118 = por %p116, %p117
      %p119 = scmp.ne.s32.totalorder %s108, %s111
      %p120 = scmp.eq.s32.totalorder %s21, 5
      %p121 = por %p119, %p120
      %p122 = scmp.ne.s32.totalorder %s111, %s112
      %p123 = scmp.eq.s32.totalorder %s21, 0
      %p124 = por %p122, %p123
      %p125 = scmp.ne.s32.totalorder %s111, %s112
      %p126 = scmp.eq.s32.totalorder %s22, 5
      %p127 = por %p125, %p126
      %p129 = scmp.ne.s32.totalorder %s112, %s128
      %p130 = scmp.eq.s32.totalorder %s22, 0
      %p131 = por %p129, %p130
      %s132 = ssub.s32 %s23, %s35
      %s133 = ssub.s32 %s24, %s31
      %s134 = sor.u32 %s132, %s133
      %p135 = scmp.eq.s32.totalorder %s134, 0
      %s137 = sadd.s32 %s136, 1
      %s138 = scalar_select %p135, %s136, %s137
      %p141 = pneg %p135
      %p142 = scmp.eq.s32.totalorder %s16, 5
      %p143 = por %p141, %p142
      %p144 = scmp.ne.s32.totalorder %s136, %s139
      %p145 = scmp.eq.s32.totalorder %s16, 0
      %p146 = por %p144, %p145
      %p147 = scmp.ne.s32.totalorder %s136, %s139
      %p148 = scmp.eq.s32.totalorder %s21, 5
      %p149 = por %p147, %p148
      %p150 = scmp.ne.s32.totalorder %s139, %s140
      %p151 = scmp.eq.s32.totalorder %s21, 0
      %p152 = por %p150, %p151
      %p153 = scmp.ne.s32.totalorder %s139, %s140
      %p154 = scmp.eq.s32.totalorder %s22, 5
      %p155 = por %p153, %p154
      %p157 = scmp.ne.s32.totalorder %s140, %s156
      %p158 = scmp.eq.s32.totalorder %s22, 0
      %p159 = por %p157, %p158
      %p160 = scmp.le.s32.totalorder 1, %s16
      %p161 = scmp.lt.s32.totalorder %s16, 7
      %p162 = pnand %p160, %p161
      %p163 = pneg %p162
      // Predicated region
      $region9: #{tpu_custom_call.1} parent=5 // pred_check
        _
      $region10: #{tpu_custom_call.1} parent=5 // pred_check_branch
        %165 = sbr.rel (%p162) target = $region12
      $region11: #{tpu_custom_call.1} parent=5 // pred_region
        %s166 = ssub.s32 %s16, 1
        // Predicated region
        $region13: #{tpu_custom_call.1} parent=11 // pred_check
          %p167 = pneg %p49
        $region14: #{tpu_custom_call.1} parent=11 // pred_check_branch
          %169 = sbr.rel (%p167) target = $region16
        $region15: #{tpu_custom_call.1} parent=11 // pred_region
          %171 = vsyncadd [#allocation3], 0
          %s173 = sshll.u32 %s0, 4
          %s174 = int_to_ptr.hbm [resolvable:$true] %s173
          %s175 = sshll.u32 [#allocation2], 4
          %s176 = int_to_ptr.vmem [resolvable:$true] %s175
          %178 = dma.hbm_to_vmem [thread:$0]  %s174, 128, %s176, [#allocation3]
        $region16: #{tpu_custom_call.1} parent=11 // pred_fallthru
          _
        // Predicated region
        $region17: #{tpu_custom_call.1} parent=11 // pred_check
          %p179 = pneg %p70
        $region18: #{tpu_custom_call.1} parent=11 // pred_check_branch
          %181 = sbr.rel (%p179) target = $region20
        $region19: #{tpu_custom_call.1} parent=11 // pred_region
          %183 = vsyncadd [#allocation4], 0
          %s185 = sshll.u32 %s1, 4
          %s186 = int_to_ptr.hbm [resolvable:$true] %s185
          %188 = dma.hbm_to_smem %s186, 16, [#allocation5], [#allocation4]
        $region20: #{tpu_custom_call.1} parent=11 // pred_fallthru
          _
      $region12: #{tpu_custom_call.1} parent=5 // pred_fallthru
        _
      %p189 = scmp.lt.s32.totalorder %s16, 6
      // Predicated region
      $region21: #{tpu_custom_call.1} parent=5 // pred_check
        %p190 = pneg %p189
      $region22: #{tpu_custom_call.1} parent=5 // pred_check_branch
        %192 = sbr.rel (%p190) target = $region24
      $region23: #{tpu_custom_call.1} parent=5 // pred_region
        // Predicated region
        $region25: #{tpu_custom_call.1} parent=23 // pred_check
          %p193 = pneg %p92
        $region26: #{tpu_custom_call.1} parent=23 // pred_check_branch
          %195 = sbr.rel (%p193) target = $region28
        $region27: #{tpu_custom_call.1} parent=23 // pred_region
          %s196 = sand.u32 %s82, 1
          %s197 = scalar_lea.sflag [#allocation7], %s196
          %s198 = sand.u32 %s82, 1
          %s199 = smul.addr %s198, 2
          %s200 = scalar_lea.vmem [#allocation6], %s199
          %202 = vsyncadd %s197, 0
          %s203 = smul.addr %s24, 2
          %s204 = smul.addr %s23, 6
          %s205 = sadd.s32 %s203, %s204
          %s206 = scalar_lea.hbm %s2, %s205
          %s208 = sshll.u32 %s206, 4
          %s209 = int_to_ptr.hbm [resolvable:$true] %s208
          %s210 = sshll.u32 %s200, 4
          %s211 = int_to_ptr.vmem [resolvable:$true] %s210
          %213 = dma.hbm_to_vmem [thread:$0]  %s209, 32, %s211, %s197
        $region28: #{tpu_custom_call.1} parent=23 // pred_fallthru
          _
      $region24: #{tpu_custom_call.1} parent=5 // pred_fallthru
        _
      %p214 = scmp.le.s32.totalorder 1, %s16
      %p215 = scmp.lt.s32.totalorder %s16, 7
      %p216 = pnand %p214, %p215
      %p217 = pneg %p216
      // Predicated region
      $region29: #{tpu_custom_call.1} parent=5 // pred_check
        _
      $region30: #{tpu_custom_call.1} parent=5 // pred_check_branch
        %219 = sbr.rel (%p216) target = $region32
      $region31: #{tpu_custom_call.1} parent=5 // pred_region
        %s220 = ssub.s32 %s16, 1
        // Predicated region
        $region33: #{tpu_custom_call.1} parent=31 // pred_check
          %p221 = pneg %p49
        $region34: #{tpu_custom_call.1} parent=31 // pred_check_branch
          %223 = sbr.rel (%p221) target = $region36
        $region35: #{tpu_custom_call.1} parent=31 // pred_region
          %225 = dma.done [#allocation3], 128
        $region36: #{tpu_custom_call.1} parent=31 // pred_fallthru
          _
        // Predicated region
        $region37: #{tpu_custom_call.1} parent=31 // pred_check
          %p226 = pneg %p70
        $region38: #{tpu_custom_call.1} parent=31 // pred_check_branch
          %228 = sbr.rel (%p226) target = $region40
        $region39: #{tpu_custom_call.1} parent=31 // pred_region
          %230 = dma.done [#allocation4], 16
        $region40: #{tpu_custom_call.1} parent=31 // pred_fallthru
          _
        %s231 = sand.u32 %s85, 1
        %s232 = scalar_lea.sflag [#allocation7], %s231
        %s233 = sand.u32 %s85, 1
        %s234 = smul.addr %s233, 2
        %s235 = scalar_lea.vmem [#allocation6], %s234
        // Predicated region
        $region41: #{tpu_custom_call.1} parent=31 // pred_check
          %p236 = pneg %p98
        $region42: #{tpu_custom_call.1} parent=31 // pred_check_branch
          %238 = sbr.rel (%p236) target = $region44
        $region43: #{tpu_custom_call.1} parent=31 // pred_region
          %240 = dma.done %s232, 32
        $region44: #{tpu_custom_call.1} parent=31 // pred_fallthru
          _
        %241 = sfence
        %p242 = pneg %p49
        %p243 = pneg %p46
        %p244 = pneg %p70
        %p245 = pneg %p67
        %s246 = sand.u32 %s85, 1
        %s247 = scalar_lea.sflag [#allocation7], %s246
        %s248 = sand.u32 %s85, 1
        %s249 = smul.addr %s248, 2
        %s250 = scalar_lea.vmem [#allocation6], %s249
        %p251 = pneg %p98
        %p252 = pneg %p95
        %p253 = pneg %p124
        %p254 = pneg %p121
        %p255 = scmp.lt.s32.totalorder %s25, 1
        %s256 = scalar_select %p255, %s25, 1
        %s257 = smul.addr %s256, 2
        %s258 = smul.addr %s257, 4
        %s259 = scalar_lea.vmem %s3, %s258
        %p260 = pneg %p152
        %p261 = pneg %p149
        %p262 = scmp.lt.s32.totalorder %s25, 1
        %s263 = scalar_select %p262, %s25, 1
        %p264 = scmp.lt.s32.totalorder %s26, 2
        %s265 = scalar_select %p264, %s26, 2
        %s266 = smul.addr %s265, 2
        %s267 = smul.addr %s263, 6
        %s268 = sadd.s32 %s266, %s267
        %s269 = smul.addr %s268, 4
        %s270 = scalar_lea.vmem %s4, %s269
        %p271 = scmp.lt.s32.totalorder %s25, 1
        %s272 = scalar_select %p271, %s25, 1
        %s273 = smul.addr %s272, 2
        %s274 = smul.addr %s273, 4
        %s275 = scalar_lea.vmem %s3, %s274
        %p276 = scmp.lt.s32.totalorder %s25, 1
        %s277 = scalar_select %p276, %s25, 1
        %p278 = scmp.lt.s32.totalorder %s26, 2
        %s279 = scalar_select %p278, %s26, 2
        %s280 = smul.addr %s279, 2
        %s281 = smul.addr %s277, 6
        %s282 = sadd.s32 %s280, %s281
        %s283 = smul.addr %s282, 4
        %s284 = scalar_lea.vmem %s4, %s283
        %v285 = vld [vmem:[%s235] sm:$0x3]
        %s286 = smul.u32 %s25, 9
        %s287 = sld [smem:[#allocation5 + %s286]]
        %v288 = vld [vmem:[#allocation2] ss:$4 sm:$0x3]
        %v289 = vstv %s287
        %v290 = vmul.f32 %v289, %v288
        %s291 = sadd.s32 %s286, 1
        %s292 = sld [smem:[#allocation5 + %s291]]
        %s293 = scalar_lea.vmem [#allocation2], 1
        %v294 = vld [vmem:[%s293] ss:$4 sm:$0x3]
        %v295 = vstv %s292
        %v296 = vmul.f32 %v295, %v294
        %v297 = vadd.f32 %v290, %v296
        %s298 = sadd.s32 %s286, 2
        %s299 = sld [smem:[#allocation5 + %s298]]
        %s300 = scalar_lea.vmem [#allocation2], 2
        %v301 = vld [vmem:[%s300] ss:$4 sm:$0x3]
        %v302 = vstv %s299
        %v303 = vmul.f32 %v302, %v301
        %v304 = vadd.f32 %v297, %v303
        %v305 = vlaneseq
        %vm306 = vcmp.ge.s32.totalorder %v305, 0
        %vm307 = vcmp.lt.s32.totalorder %v305, 256
        %vm308 = vmand %vm306, %vm307
        %309 = vst.msk [vmem:[%s275] ss:$4 sm:$0x3] %vm308, %v304
        %v310 = vmul.f32 %v304, %v285
        %311 = vst.msk [vmem:[%s284] ss:$4 sm:$0x3] %vm308, %v310
        %s312 = sadd.s32 %s286, 3
        %s313 = sld [smem:[#allocation5 + %s312]]
        %v314 = vld [vmem:[#allocation2] ss:$4 sm:$0x3]
        %v315 = vstv %s313
        %v316 = vmul.f32 %v315, %v314
        %s317 = sadd.s32 %s286, 4
        %s318 = sld [smem:[#allocation5 + %s317]]
        %v319 = vld [vmem:[%s293] ss:$4 sm:$0x3]
        %v320 = vstv %s318
        %v321 = vmul.f32 %v320, %v319
        %v322 = vadd.f32 %v316, %v321
        %s323 = sadd.s32 %s286, 5
        %s324 = sld [smem:[#allocation5 + %s323]]
        %v325 = vld [vmem:[%s300] ss:$4 sm:$0x3]
        %v326 = vstv %s324
        %v327 = vmul.f32 %v326, %v325
        %v328 = vadd.f32 %v322, %v327
        %s329 = scalar_lea.vmem %s275, 1
        %330 = vst.msk [vmem:[%s329] ss:$4 sm:$0x3] %vm308, %v328
        %v331 = vmul.f32 %v328, %v285
        %s332 = scalar_lea.vmem %s284, 1
        %333 = vst.msk [vmem:[%s332] ss:$4 sm:$0x3] %vm308, %v331
        %s334 = sadd.s32 %s286, 6
        %s335 = sld [smem:[#allocation5 + %s334]]
        %v336 = vld [vmem:[#allocation2] ss:$4 sm:$0x3]
        %v337 = vstv %s335
        %v338 = vmul.f32 %v337, %v336
        %s339 = sadd.s32 %s286, 7
        %s340 = sld [smem:[#allocation5 + %s339]]
        %v341 = vld [vmem:[%s293] ss:$4 sm:$0x3]
        %v342 = vstv %s340
        %v343 = vmul.f32 %v342, %v341
        %v344 = vadd.f32 %v338, %v343
        %s345 = sadd.s32 %s286, 8
        %s346 = sld [smem:[#allocation5 + %s345]]
        %v347 = vld [vmem:[%s300] ss:$4 sm:$0x3]
        %v348 = vstv %s346
        %v349 = vmul.f32 %v348, %v347
        %v350 = vadd.f32 %v344, %v349
        %s351 = scalar_lea.vmem %s275, 2
        %352 = vst.msk [vmem:[%s351] ss:$4 sm:$0x3] %vm308, %v350
        %v353 = vmul.f32 %v350, %v285
        %s354 = scalar_lea.vmem %s284, 2
        %355 = vst.msk [vmem:[%s354] ss:$4 sm:$0x3] %vm308, %v353
        %p356 = scmp.lt.s32.totalorder %s25, 1
        %s357 = scalar_select %p356, %s25, 1
        %s358 = smul.addr %s357, 2
        %s359 = smul.addr %s358, 4
        %s360 = scalar_lea.vmem %s3, %s359
        %p361 = scmp.lt.s32.totalorder %s25, 1
        %s362 = scalar_select %p361, %s25, 1
        %p363 = scmp.lt.s32.totalorder %s26, 2
        %s364 = scalar_select %p363, %s26, 2
        %s365 = smul.addr %s364, 2
        %s366 = smul.addr %s362, 6
        %s367 = sadd.s32 %s365, %s366
        %s368 = smul.addr %s367, 4
        %s369 = scalar_lea.vmem %s4, %s368
        // Predicated region
        $region45: #{tpu_custom_call.1} parent=31 // pred_check
          %p370 = pneg %p121
        $region46: #{tpu_custom_call.1} parent=31 // pred_check_branch
          %372 = sbr.rel (%p370) target = $region48
        $region47: #{tpu_custom_call.1} parent=31 // pred_region
          _
        $region48: #{tpu_custom_call.1} parent=31 // pred_fallthru
          _
        // Predicated region
        $region49: #{tpu_custom_call.1} parent=31 // pred_check
          %p373 = pneg %p149
        $region50: #{tpu_custom_call.1} parent=31 // pred_check_branch
          %375 = sbr.rel (%p373) target = $region52
        $region51: #{tpu_custom_call.1} parent=31 // pred_region
          _
        $region52: #{tpu_custom_call.1} parent=31 // pred_fallthru
          _
      $region32: #{tpu_custom_call.1} parent=5 // pred_fallthru
        _
      %p376 = scmp.le.s32.totalorder 2, %s16
      // Predicated region
      $region53: #{tpu_custom_call.1} parent=5 // pred_check
        %p377 = pneg %p376
      $region54: #{tpu_custom_call.1} parent=5 // pred_check_branch
        %379 = sbr.rel (%p377) target = $region56
      $region55: #{tpu_custom_call.1} parent=5 // pred_region
        %s380 = ssub.s32 %s16, 2
        // Predicated region
        $region57: #{tpu_custom_call.1} parent=55 // pred_check
          %p381 = pneg %p127
        $region58: #{tpu_custom_call.1} parent=55 // pred_check_branch
          %383 = sbr.rel (%p381) target = $region60
        $region59: #{tpu_custom_call.1} parent=55 // pred_region
          %p384 = scmp.lt.s32.totalorder %s27, 1
          %s385 = scalar_select %p384, %s27, 1
          %s386 = smul.addr %s385, 2
          %s387 = smul.addr %s386, 4
          %s388 = scalar_lea.vmem %s3, %s387
        $region60: #{tpu_custom_call.1} parent=55 // pred_fallthru
          _
        // Predicated region
        $region61: #{tpu_custom_call.1} parent=55 // pred_check
          %p389 = pneg %p155
        $region62: #{tpu_custom_call.1} parent=55 // pred_check_branch
          %391 = sbr.rel (%p389) target = $region64
        $region63: #{tpu_custom_call.1} parent=55 // pred_region
          %p392 = scmp.lt.s32.totalorder %s27, 1
          %s393 = scalar_select %p392, %s27, 1
          %p394 = scmp.lt.s32.totalorder %s28, 2
          %s395 = scalar_select %p394, %s28, 2
          %s396 = smul.addr %s395, 2
          %s397 = smul.addr %s393, 6
          %s398 = sadd.s32 %s396, %s397
          %s399 = smul.addr %s398, 4
          %s400 = scalar_lea.vmem %s4, %s399
        $region64: #{tpu_custom_call.1} parent=55 // pred_fallthru
          _
      $region56: #{tpu_custom_call.1} parent=5 // pred_fallthru
        _
    $region6: #{tpu_custom_call.1} parent=1 // loop_footer
      %s20 = sadd.s32 1, %s16
    $region7: #{tpu_custom_call.1} parent=1 // loop_footer_branch
      %15 = sbr.rel target = $region3
    $region8: #{tpu_custom_call.1} parent=1 // loop_exit
      _
    %401 = vsyncpa [#allocation3], 1
    %s402 = scalar_lea.sflag [#allocation3], 1
    %403 = vsyncpa %s402, 1
    %404 = vsyncpa [#allocation7], 1
    %s405 = scalar_lea.sflag [#allocation7], 1
    %406 = vsyncpa %s405, 1
    %407 = vsyncpa [#allocation4], 1
    %s408 = scalar_lea.sflag [#allocation4], 1
    %409 = vsyncpa %s408, 1

</llo_original>
